<compile_context>
chip_gen: v7x
topology: tpu7x:2x2x1
jax: 0.10.0
libtpu: 0.0.40
codegen_flags: <defaults>
</compile_context>

<pallas_src>
import jax
import jax.numpy as jnp
from jax.experimental import pallas as pl
from jax.experimental.pallas import tpu as pltpu

INPUT_SIZE = 42
HIDDEN_SIZE = 64
OUTPUT_SIZE = 6
TILE_B_MAX = 4096     # rows per grid step


def _round_up(x, m):
    return ((x + m - 1) // m) * m


def teacher_mlp_kernel(x_ref, w1_ref, b1_ref, w2_ref, b2_ref, o_ref):
    # fc1: [TILE_B, 42] @ [42, 64] + [1, 64]; f32 accumulation on the MXU.
    x = x_ref[...].astype(jnp.float32)          # no-op for f32, cheap for bf16
    h = jnp.dot(x, w1_ref[...], preferred_element_type=jnp.float32)
    h = jnp.maximum(h + b1_ref[...], 0.0)       # ReLU
    # fc2: [TILE_B, 64] @ [64, 6] + [1, 6]; store only the 6 real Q-columns.
    out = jnp.dot(h, w2_ref[...], preferred_element_type=jnp.float32)
    o_ref[...] = (out + b2_ref[...]).astype(o_ref.dtype)


def teacher_forward(x, w1, b1, w2, b2):
    """x: [B, 42] (f32 or bf16) -> [B, 6] float32 Q-values.

    Weights are stored [in, out] (transpose of PyTorch's [out, in]).
    """
    B = x.shape[0]
    b1_2d = b1.reshape(1, HIDDEN_SIZE).astype(jnp.float32)
    b2_2d = b2.reshape(1, OUTPUT_SIZE).astype(jnp.float32)

    # --- batch tile selection: big tiles to amortize per-step overhead ------
    tile_b = min(TILE_B_MAX, _round_up(B, 8))
    # Guarantee grid >= 2 for non-trivial batches so v7x's two TensorCores
    # both get work (no effect on single-TC v5e/v6e beyond smaller tiles).
    if pl.cdiv(B, tile_b) < 2 and B >= 512:
        tile_b = _round_up(pl.cdiv(B, 2), 256)

    grid = (pl.cdiv(B, tile_b),)   # ragged tail handled by Pallas (no jnp.pad)

    return pl.pallas_call(
        teacher_mlp_kernel,
        out_shape=jax.ShapeDtypeStruct((B, OUTPUT_SIZE), jnp.float32),
        grid_spec=pl.GridSpec(
            grid=grid,
            in_specs=[
                # x: one batch tile per grid step (double-buffered by Pallas).
                pl.BlockSpec((tile_b, INPUT_SIZE), lambda i: (i, 0)),
                # Weights / biases: constant block index -> DMA'd once, VMEM-resident.
                pl.BlockSpec((INPUT_SIZE, HIDDEN_SIZE), lambda i: (0, 0)),
                pl.BlockSpec((1, HIDDEN_SIZE), lambda i: (0, 0)),
                pl.BlockSpec((HIDDEN_SIZE, OUTPUT_SIZE), lambda i: (0, 0)),
                pl.BlockSpec((1, OUTPUT_SIZE), lambda i: (0, 0)),
            ],
            out_specs=pl.BlockSpec((tile_b, OUTPUT_SIZE), lambda i: (i, 0)),
        ),
        compiler_params=pltpu.CompilerParams(
            # Batch tiles are fully independent -> shard across both TCs on v7x.
            dimension_semantics=("parallel",),
            # Headroom for the 4096-row tile on v5e's smaller default scoped VMEM.
            vmem_limit_bytes=32 * 1024 * 1024,
        ),
    )(x, w1, b1_2d, w2, b2_2d)


def init_params(key):
    """Init mimicking PyTorch nn.Linear default: U[-1/sqrt(fan_in), +1/sqrt(fan_in)]."""
    k1, k2, k3, k4 = jax.random.split(key, 4)
    bound1 = 1.0 / jnp.sqrt(jnp.float32(INPUT_SIZE))
    bound2 = 1.0 / jnp.sqrt(jnp.float32(HIDDEN_SIZE))
    w1 = jax.random.uniform(k1, (INPUT_SIZE, HIDDEN_SIZE), jnp.float32, -bound1, bound1)
    b1 = jax.random.uniform(k2, (HIDDEN_SIZE,), jnp.float32, -bound1, bound1)
    w2 = jax.random.uniform(k3, (HIDDEN_SIZE, OUTPUT_SIZE), jnp.float32, -bound2, bound2)
    b2 = jax.random.uniform(k4, (OUTPUT_SIZE,), jnp.float32, -bound2, bound2)
    return w1, b1, w2, b2


if __name__ == "__main__":
    key = jax.random.PRNGKey(0)
    kx, kp = jax.random.split(key)

    # Small batch of 42-dim feature vectors (same shape state_to_features produces).
    B = 2
    x = jax.random.normal(kx, (B, INPUT_SIZE), dtype=jnp.float32)
    w1, b1, w2, b2 = init_params(kp)

    # Pure-JAX reference.
    ref = jnp.maximum(x @ w1 + b1, 0.0) @ w2 + b2

    # Exact (f32) path — preserves the original module semantics.
    q = teacher_forward(x, w1, b1, w2, b2)
    q = jax.block_until_ready(q)
    assert q.shape == (B, OUTPUT_SIZE)
    assert jnp.allclose(q, ref, atol=1e-5, rtol=1e-5)

    # Caller-supplied bf16 features (no wrapper cast) — relaxed tolerance.
    q_bf16 = teacher_forward(x.astype(jnp.bfloat16), w1, b1, w2, b2)
    q_bf16 = jax.block_until_ready(q_bf16)
    assert jnp.allclose(q_bf16, ref, atol=3e-2, rtol=3e-2)

    # Larger, non-divisible batch: exercises grid > 1 and the ragged tail block.
    B_big = 2048 + 17
    x_big = jax.random.normal(kx, (B_big, INPUT_SIZE), dtype=jnp.float32)
    q_big = jax.block_until_ready(teacher_forward(x_big, w1, b1, w2, b2))
    ref_big = jnp.maximum(x_big @ w1 + b1, 0.0) @ w2 + b2
    assert q_big.shape == (B_big, OUTPUT_SIZE)
    assert jnp.allclose(q_big, ref_big, atol=1e-4, rtol=1e-4)

    print("KERNEL_OK")
</pallas_src>

<mosaic_0001>
module attributes {stable_mosaic.version = 11 : i64} {
  func.func @teacher_mlp_kernel(%arg0: i32, %arg1: memref<8x42xf32, #tpu.memory_space<vmem>>, %arg2: memref<42x64xf32, #tpu.memory_space<vmem>>, %arg3: memref<1x64xf32, #tpu.memory_space<vmem>>, %arg4: memref<64x6xf32, #tpu.memory_space<vmem>>, %arg5: memref<1x6xf32, #tpu.memory_space<vmem>>, %arg6: memref<8x6xf32, #tpu.memory_space<vmem>>) attributes {dimension_semantics = [#tpu.dimension_semantics<parallel>], iteration_bounds = array<i64: 1>, scalar_prefetch = 0 : i64, scratch_operands = 0 : i64, tpu.core_type = #tpu.core_type<tc>, window_params = [{transform_indices = @transform_0, window_bounds = array<i64: 8, 42>}, {pipeline_mode = #tpu.pipeline_mode<synchronous>, transform_indices = @transform_1, window_bounds = array<i64: 42, 64>}, {pipeline_mode = #tpu.pipeline_mode<synchronous>, transform_indices = @transform_2, window_bounds = array<i64: 1, 64>}, {pipeline_mode = #tpu.pipeline_mode<synchronous>, transform_indices = @transform_3, window_bounds = array<i64: 64, 6>}, {pipeline_mode = #tpu.pipeline_mode<synchronous>, transform_indices = @transform_4, window_bounds = array<i64: 1, 6>}, {transform_indices = @transform_5, window_bounds = array<i64: 8, 6>}]} {
    %c0 = arith.constant 0 : index
    %c0_0 = arith.constant 0 : index
    %0 = vector.load %arg1[%c0, %c0_0] : memref<8x42xf32, #tpu.memory_space<vmem>>, vector<8x42xf32>
    %c0_1 = arith.constant 0 : index
    %c0_2 = arith.constant 0 : index
    %1 = vector.load %arg2[%c0_1, %c0_2] : memref<42x64xf32, #tpu.memory_space<vmem>>, vector<42x64xf32>
    %cst = arith.constant dense<0.000000e+00> : vector<8x64xf32>
    %2 = tpu.matmul %0, %1, %cst {dimension_numbers = #tpu.dot_dimension_numbers<[1], [0], [0], [1], [0, 0, 1, 1], [], []>} : vector<8x42xf32>, vector<42x64xf32>, vector<8x64xf32> -> vector<8x64xf32>
    %c0_3 = arith.constant 0 : index
    %c0_4 = arith.constant 0 : index
    %3 = vector.load %arg3[%c0_3, %c0_4] : memref<1x64xf32, #tpu.memory_space<vmem>>, vector<1x64xf32>
    %4 = vector.broadcast %3 : vector<1x64xf32> to vector<8x64xf32>
    %5 = arith.addf %2, %4 : vector<8x64xf32>
    %cst_5 = arith.constant 0.000000e+00 : f32
    %6 = vector.broadcast %cst_5 : f32 to vector<8x64xf32>
    %7 = arith.maximumf %5, %6 : vector<8x64xf32>
    %c0_6 = arith.constant 0 : index
    %c0_7 = arith.constant 0 : index
    %8 = vector.load %arg4[%c0_6, %c0_7] : memref<64x6xf32, #tpu.memory_space<vmem>>, vector<64x6xf32>
    %cst_8 = arith.constant dense<0.000000e+00> : vector<8x6xf32>
    %9 = tpu.matmul %7, %8, %cst_8 {dimension_numbers = #tpu.dot_dimension_numbers<[1], [0], [0], [1], [0, 0, 1, 1], [], []>} : vector<8x64xf32>, vector<64x6xf32>, vector<8x6xf32> -> vector<8x6xf32>
    %c0_9 = arith.constant 0 : index
    %c0_10 = arith.constant 0 : index
    %10 = vector.load %arg5[%c0_9, %c0_10] : memref<1x6xf32, #tpu.memory_space<vmem>>, vector<1x6xf32>
    %11 = vector.broadcast %10 : vector<1x6xf32> to vector<8x6xf32>
    %12 = arith.addf %9, %11 : vector<8x6xf32>
    %c0_11 = arith.constant 0 : index
    %c0_12 = arith.constant 0 : index
    %13 = vector.load %arg6[%c0_11, %c0_12] : memref<8x6xf32, #tpu.memory_space<vmem>>, vector<8x6xf32>
    tpu.vector_store %arg6[%c0_11, %c0_12], %12 {strides = array<i32>} : memref<8x6xf32, #tpu.memory_space<vmem>>, vector<8x6xf32>,
    return
  }
  func.func @transform_0(%arg0: i32) -> (i32, i32) {
    %c0_i32 = arith.constant 0 : i32
    %c0_i32_0 = arith.constant 0 : i32
    return %arg0, %c0_i32 : i32, i32
  }
  func.func @transform_1(%arg0: i32) -> (i32, i32) {
    %c0_i32 = arith.constant 0 : i32
    %c0_i32_0 = arith.constant 0 : i32
    %c0_i32_1 = arith.constant 0 : i32
    return %c0_i32, %c0_i32_0 : i32, i32
  }
  func.func @transform_2(%arg0: i32) -> (i32, i32) {
    %c0_i32 = arith.constant 0 : i32
    %c0_i32_0 = arith.constant 0 : i32
    %c0_i32_1 = arith.constant 0 : i32
    return %c0_i32, %c0_i32_0 : i32, i32
  }
  func.func @transform_3(%arg0: i32) -> (i32, i32) {
    %c0_i32 = arith.constant 0 : i32
    %c0_i32_0 = arith.constant 0 : i32
    %c0_i32_1 = arith.constant 0 : i32
    return %c0_i32, %c0_i32_0 : i32, i32
  }
  func.func @transform_4(%arg0: i32) -> (i32, i32) {
    %c0_i32 = arith.constant 0 : i32
    %c0_i32_0 = arith.constant 0 : i32
    %c0_i32_1 = arith.constant 0 : i32
    return %c0_i32, %c0_i32_0 : i32, i32
  }
  func.func @transform_5(%arg0: i32) -> (i32, i32) {
    %c0_i32 = arith.constant 0 : i32
    %c0_i32_0 = arith.constant 0 : i32
    return %arg0, %c0_i32 : i32, i32
  }
}

</mosaic_0001>

<llo_original>
// kernel: tpu_custom_call.1
$region0: #{tpu_custom_call.1}
  #allocation0 [shape = 'u32[]', space=smem, size = 0x4, offset = 0x4, fixed_abs, tag = 'smem constant byte address 0x4 - core index']
  #allocation1 [shape = 'u32[144,128]{1,0:T(1,128)}', space=vmem, size = 0x12000, scoped, tag = 'internal scratch']
  %s0 = inlined_call_operand.vmem [shape: f32[2,42], index: 0, kind: input, shape index: {}]
  %s1 = inlined_call_operand.vmem [shape: f32[42,64], index: 1, kind: input, shape index: {}]
  %s2 = inlined_call_operand.vmem [shape: f32[1,64], index: 2, kind: input, shape index: {}]
  %s3 = inlined_call_operand.vmem [shape: f32[64,6], index: 3, kind: input, shape index: {}]
  %s4 = inlined_call_operand.vmem [shape: f32[1,6], index: 4, kind: input, shape index: {}]
  %s5 = inlined_call_operand.hbm [shape: f32[2,6], index: 5, kind: output, shape index: {}]
  %s6 = sld [smem:[#allocation0]]
  $region30: #{tpu_custom_call.1} parent=0
    _
  %s8 = ssub.s32 1, %s6
  %s9 = scalar_select 0, %s8, %s6
  $region1: #{tpu_custom_call.1} parent=0
    #allocation2 [shape = 'u8[4096]{0}', space=vmem, size = 0x1000, scoped, tag = 'output window, operand 0, single buffered']
    #allocation3 [shape = 's32[1]{0}', space=sflag, size = 0x4, scoped, tag = 'scoped memory for tpu_custom_call.1']
    %10 = vsyncpa [#allocation3], 0
    // Predicated region
    $region2: #{tpu_custom_call.1} parent=1 // pred_check
      _
    $region3: #{tpu_custom_call.1} parent=1 // pred_check_branch
      %12 = sbr.rel (0) target = $region5
    $region4: #{tpu_custom_call.1} parent=1 // pred_region
      _
    $region5: #{tpu_custom_call.1} parent=1 // pred_fallthru
      _
    // Predicated region
    $region6: #{tpu_custom_call.1} parent=1 // pred_check
      _
    $region7: #{tpu_custom_call.1} parent=1 // pred_check_branch
      %14 = sbr.rel (0) target = $region9
    $region8: #{tpu_custom_call.1} parent=1 // pred_region
      _
    $region9: #{tpu_custom_call.1} parent=1 // pred_fallthru
      _
    // Predicated region
    $region10: #{tpu_custom_call.1} parent=1 // pred_check
      _
    $region11: #{tpu_custom_call.1} parent=1 // pred_check_branch
      %16 = sbr.rel (0) target = $region13
    $region12: #{tpu_custom_call.1} parent=1 // pred_region
      _
    $region13: #{tpu_custom_call.1} parent=1 // pred_fallthru
      _
    // Predicated region
    $region14: #{tpu_custom_call.1} parent=1 // pred_check
      _
    $region15: #{tpu_custom_call.1} parent=1 // pred_check_branch
      %18 = sbr.rel (0) target = $region17
    $region16: #{tpu_custom_call.1} parent=1 // pred_region
      _
    $region17: #{tpu_custom_call.1} parent=1 // pred_fallthru
      _
    // Predicated region
    $region18: #{tpu_custom_call.1} parent=1 // pred_check
      _
    $region19: #{tpu_custom_call.1} parent=1 // pred_check_branch
      %20 = sbr.rel (0) target = $region21
    $region20: #{tpu_custom_call.1} parent=1 // pred_region
      _
    $region21: #{tpu_custom_call.1} parent=1 // pred_fallthru
      _
    %v21 = vld [vmem:[%s0] sm:$0xff]
    %v22 = vld [vmem:[%s1] sm:$0xff]
    %v23 = vld [vmem:[%s1 + $0x8] sm:$0xff]
    %v24 = vld [vmem:[%s1 + $0x10] sm:$0xff]
    %v25 = vld [vmem:[%s1 + $0x18] sm:$0xff]
    %v26 = vld [vmem:[%s1 + $0x20] sm:$0xff]
    %v27 = vld [vmem:[%s1 + $0x28] sm:$0x3]
    %v28 = vld [vmem:[%s2] sm:$0x1]
    %v30 = vlaneseq
    %v31 = vshrl.u32 %v30, 7
    %v32 = vsub.s32 0, %v31
    %v33 = vrot.slane %v28, %v32
    %vm35 = vcmask 343040
    %v37 = vsel %vm35, %v21, 0
    %vm39 = vcmask 1041408
    %v41 = vsel %vm39, %v27, 0
    %43 = vmatprep.subr.mxu0 0.0
    %44 = vmatpush1.msra.mxu0 %v22
    %45 = vmatprep.subr.mxu0 0.0
    %46 = vmatpush1.msra.mxu0 %v23
    %47 = vmatprep.subr.mxu0 0.0
    %48 = vmatpush1.msra.mxu0 %v24
    %49 = vmatprep.subr.mxu0 0.0
    %50 = vmatpush1.msra.mxu0 %v25
    %51 = vmatprep.subr.mxu0 0.0
    %52 = vmatpush1.msra.mxu0 %v26
    %53 = vmatprep.subr.mxu0 0.0
    %54 = vmatpush1.msra.mxu0 %v41
    %55 = vmatprep.subr.mxu0 0.0
    %56 = vmatpush1.msra.mxu0 0.0
    %57 = vmatprep.subr.mxu0 0.0
    %58 = vmatpush1.msra.mxu0 0.0
    %59 = vmatprep.subr.mxu0 0.0
    %60 = vmatpush1.msra.mxu0 0.0
    %61 = vmatprep.subr.mxu0 0.0
    %62 = vmatpush1.msra.mxu0 0.0
    %63 = vmatprep.subr.mxu0 0.0
    %64 = vmatpush1.msra.mxu0 0.0
    %65 = vmatprep.subr.mxu0 0.0
    %66 = vmatpush1.msra.mxu0 0.0
    %67 = vmatprep.subr.mxu0 0.0
    %68 = vmatpush1.msra.mxu0 0.0
    %69 = vmatprep.subr.mxu0 0.0
    %70 = vmatpush1.msra.mxu0 0.0
    %71 = vmatprep.subr.mxu0 0.0
    %72 = vmatpush1.msra.mxu0 0.0
    %73 = vmatprep.subr.mxu0 0.0
    %74 = vmatpush1.msra.mxu0 0.0
    %75 = vmatprep.subr.mxu0 0.0
    %76 = vmatpush1.msra.mxu0 0.0
    %77 = vmatprep.subr.mxu0 0.0
    %78 = vmatpush1.msra.mxu0 0.0
    %79 = vmatprep.subr.mxu0 0.0
    %80 = vmatpush1.msra.mxu0 0.0
    %81 = vmatprep.subr.mxu0 0.0
    %82 = vmatpush1.msra.mxu0 0.0
    %83 = vmatprep.subr.mxu0 0.0
    %84 = vmatpush1.msra.mxu0 0.0
    %85 = vmatprep.subr.mxu0 0.0
    %86 = vmatpush1.msra.mxu0 0.0
    %87 = vmatprep.subr.mxu0 0.0
    %88 = vmatpush1.msra.mxu0 0.0
    %89 = vmatprep.subr.mxu0 0.0
    %90 = vmatpush1.msra.mxu0 0.0
    %91 = vmatprep.subr.mxu0 0.0
    %92 = vmatpush1.msra.mxu0 0.0
    %93 = vmatprep.subr.mxu0 0.0
    %94 = vmatpush1.msra.mxu0 0.0
    %95 = vmatprep.subr.mxu0 0.0
    %96 = vmatpush1.msra.mxu0 0.0
    %97 = vmatprep.subr.mxu0 0.0
    %98 = vmatpush1.msra.mxu0 0.0
    %99 = vmatprep.subr.mxu0 0.0
    %100 = vmatpush1.msra.mxu0 0.0
    %101 = vmatprep.subr.mxu0 0.0
    %102 = vmatpush1.msra.mxu0 0.0
    %103 = vmatprep.subr.mxu0 0.0
    %104 = vmatpush1.msra.mxu0 0.0
    %105 = vmatprep.subr.mxu0 0.0
    %106 = vmatpush1.msra.mxu0 0.0
    %107 = vmatprep.mubr.f32.mxu0 0.0
    %108 = vmatmul.mubr.f32.gmra.mrb[0].mxu0 %v37
    %v109 = vpop.f32.mrb[0].mxu0
    %v110 = vadd.f32 %v33, %v109
    %v111 = vpop.f32.mrb[0].mxu0
    %112 = vdwg.mxu0
    %v113 = vmax.f32 %v110, 0.0
    %v114 = vld [vmem:[%s3] sm:$0xff]
    %v115 = vld [vmem:[%s3 + $0x8] sm:$0xff]
    %v116 = vld [vmem:[%s3 + $0x10] sm:$0xff]
    %v117 = vld [vmem:[%s3 + $0x18] sm:$0xff]
    %v118 = vld [vmem:[%s3 + $0x20] sm:$0xff]
    %v119 = vld [vmem:[%s3 + $0x28] sm:$0xff]
    %v120 = vld [vmem:[%s3 + $0x30] sm:$0xff]
    %v121 = vld [vmem:[%s3 + $0x38] sm:$0xff]
    %v122 = vld [vmem:[%s4] sm:$0x1]
    %v124 = vlaneseq
    %v125 = vshrl.u32 %v124, 7
    %v126 = vsub.s32 0, %v125
    %v127 = vrot.slane %v122, %v126
    %vm129 = vcmask 523264
    %v131 = vsel %vm129, %v113, 0
    %133 = vmatprep.subr.mxu0 0.0
    %134 = vmatpush1.msra.mxu0 %v114
    %135 = vmatprep.subr.mxu0 0.0
    %136 = vmatpush1.msra.mxu0 %v115
    %137 = vmatprep.subr.mxu0 0.0
    %138 = vmatpush1.msra.mxu0 %v116
    %139 = vmatprep.subr.mxu0 0.0
    %140 = vmatpush1.msra.mxu0 %v117
    %141 = vmatprep.subr.mxu0 0.0
    %142 = vmatpush1.msra.mxu0 %v118
    %143 = vmatprep.subr.mxu0 0.0
    %144 = vmatpush1.msra.mxu0 %v119
    %145 = vmatprep.subr.mxu0 0.0
    %146 = vmatpush1.msra.mxu0 %v120
    %147 = vmatprep.subr.mxu0 0.0
    %148 = vmatpush1.msra.mxu0 %v121
    %149 = vmatprep.subr.mxu0 0.0
    %150 = vmatpush1.msra.mxu0 0.0
    %151 = vmatprep.subr.mxu0 0.0
    %152 = vmatpush1.msra.mxu0 0.0
    %153 = vmatprep.subr.mxu0 0.0
    %154 = vmatpush1.msra.mxu0 0.0
    %155 = vmatprep.subr.mxu0 0.0
    %156 = vmatpush1.msra.mxu0 0.0
    %157 = vmatprep.subr.mxu0 0.0
    %158 = vmatpush1.msra.mxu0 0.0
    %159 = vmatprep.subr.mxu0 0.0
    %160 = vmatpush1.msra.mxu0 0.0
    %161 = vmatprep.subr.mxu0 0.0
    %162 = vmatpush1.msra.mxu0 0.0
    %163 = vmatprep.subr.mxu0 0.0
    %164 = vmatpush1.msra.mxu0 0.0
    %165 = vmatprep.subr.mxu0 0.0
    %166 = vmatpush1.msra.mxu0 0.0
    %167 = vmatprep.subr.mxu0 0.0
    %168 = vmatpush1.msra.mxu0 0.0
    %169 = vmatprep.subr.mxu0 0.0
    %170 = vmatpush1.msra.mxu0 0.0
    %171 = vmatprep.subr.mxu0 0.0
    %172 = vmatpush1.msra.mxu0 0.0
    %173 = vmatprep.subr.mxu0 0.0
    %174 = vmatpush1.msra.mxu0 0.0
    %175 = vmatprep.subr.mxu0 0.0
    %176 = vmatpush1.msra.mxu0 0.0
    %177 = vmatprep.subr.mxu0 0.0
    %178 = vmatpush1.msra.mxu0 0.0
    %179 = vmatprep.subr.mxu0 0.0
    %180 = vmatpush1.msra.mxu0 0.0
    %181 = vmatprep.subr.mxu0 0.0
    %182 = vmatpush1.msra.mxu0 0.0
    %183 = vmatprep.subr.mxu0 0.0
    %184 = vmatpush1.msra.mxu0 0.0
    %185 = vmatprep.subr.mxu0 0.0
    %186 = vmatpush1.msra.mxu0 0.0
    %187 = vmatprep.subr.mxu0 0.0
    %188 = vmatpush1.msra.mxu0 0.0
    %189 = vmatprep.subr.mxu0 0.0
    %190 = vmatpush1.msra.mxu0 0.0
    %191 = vmatprep.subr.mxu0 0.0
    %192 = vmatpush1.msra.mxu0 0.0
    %193 = vmatprep.subr.mxu0 0.0
    %194 = vmatpush1.msra.mxu0 0.0
    %195 = vmatprep.subr.mxu0 0.0
    %196 = vmatpush1.msra.mxu0 0.0
    %197 = vmatprep.mubr.f32.mxu0 0.0
    %198 = vmatmul.mubr.f32.gmra.mrb[0].mxu0 %v131
    %v199 = vpop.f32.mrb[0].mxu0
    %v200 = vadd.f32 %v127, %v199
    %v201 = vpop.f32.mrb[0].mxu0
    %202 = vdwg.mxu0
    %vm203 = vcmask 48128
    %204 = vst.msk [vmem:[#allocation2] sm:$0xff] %vm203, %v200
    // Predicated region
    $region22: #{tpu_custom_call.1} parent=1 // pred_check
      _
    $region23: #{tpu_custom_call.1} parent=1 // pred_check_branch
      %206 = sbr.rel (0) target = $region25
    $region24: #{tpu_custom_call.1} parent=1 // pred_region
      %s208 = ssub.s32 128, 32
      %209 = vsyncadd [#allocation3], %s208
      %s210 = sshll.u32 [#allocation2], 4
      %s211 = int_to_ptr.vmem [resolvable:$true] %s210
      %216 = dma.vmem_to_hbm [thread:$0]  %s211, 32, %s5, [#allocation3], 32, 32, 2
    $region25: #{tpu_custom_call.1} parent=1 // pred_fallthru
      _
    // Predicated region
    $region26: #{tpu_custom_call.1} parent=1 // pred_check
      _
    $region27: #{tpu_custom_call.1} parent=1 // pred_check_branch
      %218 = sbr.rel (0) target = $region29
    $region28: #{tpu_custom_call.1} parent=1 // pred_region
      %219 = dma.done [#allocation3], 128
    $region29: #{tpu_custom_call.1} parent=1 // pred_fallthru
      _
    %220 = vsyncpa [#allocation3], 1

</llo_original>
